<compile_context>
chip_gen: v6e
topology: v6e:2x2x1
jax: 0.10.0
libtpu: 0.0.40
codegen_flags: <defaults>
</compile_context>

<pallas_src>
import jax
import jax.numpy as jnp
import numpy as np
from jax.experimental import pallas as pl
from jax.experimental.pallas import tpu as pltpu

# ---- hyperparams implied by MGAT.__init__ ----
INPUT = 10     # LSTM input size
HIDDEN = 2     # LSTM hidden size
LAYERS = 2     # LSTM num layers
SEQ = 5        # seq_len: Flatten + Linear(10,1) => SEQ * HIDDEN == 10
LIN_IN = SEQ * HIDDEN
LIN_OUT = 1
assert SEQ * HIDDEN == LIN_IN, "Flatten+Linear(10,1) requires seq_len*hidden == 10"

# ---- packed-parameter slab column layout (all static) ----
C_WIH0 = 0                      # cols  0:10  W_ih0  (4H, IN)
C_WHH0 = C_WIH0 + INPUT         # cols 10:12  W_hh0  (4H, H)
C_WIH1 = C_WHH0 + HIDDEN        # cols 12:14  W_ih1  (4H, H)
C_WHH1 = C_WIH1 + HIDDEN        # cols 14:16  W_hh1  (4H, H)
C_B0 = C_WHH1 + HIDDEN          # col  16     b_ih0 + b_hh0
C_B1 = C_B0 + 1                 # col  17     b_ih1 + b_hh1
C_WLIN = C_B1 + 1               # cols 18:23  Linear weight as (H, SEQ) in rows 0:H
C_BLIN = C_WLIN + SEQ           # col  23     Linear bias at row 0
PARAM_COLS = C_BLIN + 1         # 24


def _mgat_kernel(xall_ref, state_ref, w_ref, out_ref):
    """Whole MGAT forward. Batch lives on lanes; 4H gate rows on sublanes."""
    H = HIDDEN
    B = xall_ref.shape[1] // SEQ          # x_all columns are t-major, b-minor

    # Single packed parameter tile (one vreg after padding); static slices.
    w = w_ref[...]                        # (4H, PARAM_COLS)
    w_ih0 = w[:, C_WIH0:C_WIH0 + INPUT]   # (4H, IN)
    w_hh0 = w[:, C_WHH0:C_WHH0 + H]       # (4H, H)
    w_ih1 = w[:, C_WIH1:C_WIH1 + H]       # (4H, H)
    w_hh1 = w[:, C_WHH1:C_WHH1 + H]       # (4H, H)
    b0 = w[:, C_B0:C_B0 + 1]              # (4H, 1)
    b1 = w[:, C_B1:C_B1 + 1]              # (4H, 1)
    wlin = w[0:H, C_WLIN:C_WLIN + SEQ]    # (H, SEQ): one (i,f)-pair per step
    blin = w[0:1, C_BLIN:C_BLIN + 1]      # (1, 1)

    x_all = xall_ref[...]                 # (IN, SEQ*B), columns (t, b)

    # Hoisted layer-0 input projection: IN=10 VPU broadcast MACs over the
    # whole (4H, SEQ*B) tile -- no MXU, nothing on the serial recurrence path.
    xg_all = b0 + w_ih0[:, 0:1] * x_all[0:1, :]
    for k in range(1, INPUT):
        xg_all = xg_all + w_ih0[:, k:k + 1] * x_all[k:k + 1, :]

    def matvec_h(wmat, h):
        # (4H, H) @ (H, B) with H == 2: two VPU broadcast multiply-adds.
        r = wmat[:, 0:1] * h[0:1, :]
        for j in range(1, H):
            r = r + wmat[:, j:j + 1] * h[j:j + 1, :]
        return r

    def gate_apply(gates, c):
        # sigmoid(x) = 0.5 + 0.5*tanh(0.5*x): every activation is one EUP
        # vtanh over the whole (4H, B) tile plus cheap VPU ops.
        sg = 0.5 + 0.5 * jnp.tanh(0.5 * gates)
        tg = jnp.tanh(gates)
        i = sg[0 * H:1 * H, :]
        f = sg[1 * H:2 * H, :]
        g = tg[2 * H:3 * H, :]
        o = sg[3 * H:4 * H, :]
        c_new = f * c + i * g
        h_new = o * jnp.tanh(c_new)
        return h_new, c_new

    # Initial states from the packed (2*L*H, B) slab.
    h_l0 = state_ref[0 * H:1 * H, :]
    h_l1 = state_ref[1 * H:2 * H, :]
    c_l0 = state_ref[2 * H:3 * H, :]
    c_l1 = state_ref[3 * H:4 * H, :]

    # Fused Flatten + Linear accumulator.
    acc = jnp.zeros((H, B), jnp.float32)

    # SEQ is a tiny compile-time constant -> static unroll so the LLO
    # scheduler sees the whole dependence graph.
    for t in range(SEQ):
        xg_t = xg_all[:, t * B:(t + 1) * B]              # (4H, B) static slice

        # layer 0: input term precomputed; recurrent term on the VPU.
        g0 = xg_t + matvec_h(w_hh0, h_l0)
        h_l0, c_l0 = gate_apply(g0, c_l0)

        # layer 1: both contractions are K=2 -> all VPU, zero MXU anywhere.
        g1 = b1 + matvec_h(w_ih1, h_l0) + matvec_h(w_hh1, h_l1)
        h_l1, c_l1 = gate_apply(g1, c_l1)

        # nn.Flatten + nn.Linear(10, 1), fused as a running VPU MAC.
        acc = acc + h_l1 * wlin[:, t:t + 1]

    # Single packed output buffer: row 0 = out, rows 1:5 = h_n, rows 5:9 = c_n.
    out_ref[0:1, :] = acc[0:1, :] + acc[1:2, :] + blin
    out_ref[1:1 + H, :] = h_l0
    out_ref[1 + H:1 + 2 * H, :] = h_l1
    out_ref[1 + 2 * H:1 + 3 * H, :] = c_l0
    out_ref[1 + 3 * H:1 + 4 * H, :] = c_l1


def pack_kernel_params(p):
    """Build the single (4H, 24) parameter slab ONCE at init (cached)."""
    h4 = 4 * HIDDEN
    slab = jnp.zeros((h4, PARAM_COLS), jnp.float32)
    slab = slab.at[:, C_WIH0:C_WIH0 + INPUT].set(p["w_ih0"].astype(jnp.float32))
    slab = slab.at[:, C_WHH0:C_WHH0 + HIDDEN].set(p["w_hh0"].astype(jnp.float32))
    slab = slab.at[:, C_WIH1:C_WIH1 + HIDDEN].set(p["w_ih1"].astype(jnp.float32))
    slab = slab.at[:, C_WHH1:C_WHH1 + HIDDEN].set(p["w_hh1"].astype(jnp.float32))
    slab = slab.at[:, C_B0].set((p["b_ih0"] + p["b_hh0"]).astype(jnp.float32))
    slab = slab.at[:, C_B1].set((p["b_ih1"] + p["b_hh1"]).astype(jnp.float32))
    wlin_pairs = p["w_lin"].reshape(SEQ, HIDDEN).T.astype(jnp.float32)   # (H, SEQ)
    slab = slab.at[0:HIDDEN, C_WLIN:C_WLIN + SEQ].set(wlin_pairs)
    slab = slab.at[0, C_BLIN].set(p["b_lin"][0].astype(jnp.float32))
    return slab


def mgat_forward(x, h0, c0, w_slab):
    """Pallas-backed MGAT forward. Returns (out, (h_n, c_n)). Jit this."""
    B, T, F = x.shape
    assert T == SEQ and F == INPUT, "Flatten+Linear(10,1) requires x of shape (B, 5, 10)"
    assert SEQ * HIDDEN == LIN_IN

    # Layout plumbing (fused under jit): x -> (IN, SEQ*B) with batch on lanes;
    # h0/c0 -> one packed (2*L*H, B) state slab.
    x_all = jnp.transpose(x.astype(jnp.float32), (2, 1, 0)).reshape(INPUT, SEQ * B)
    state = jnp.concatenate(
        [jnp.transpose(h0.astype(jnp.float32), (0, 2, 1)).reshape(LAYERS * HIDDEN, B),
         jnp.transpose(c0.astype(jnp.float32), (0, 2, 1)).reshape(LAYERS * HIDDEN, B)],
        axis=0)                                              # (2*L*H, B)

    # NOTE: gridless single invocation is right at this size; for large B add
    # a leading batch grid axis with dimension_semantics=("parallel",) so
    # v7x's second TensorCore splits the batch.
    vmem = pl.BlockSpec(memory_space=pltpu.MemorySpace.VMEM)
    packed = pl.pallas_call(
        _mgat_kernel,
        out_shape=jax.ShapeDtypeStruct((1 + 2 * LAYERS * HIDDEN, B), jnp.float32),
        in_specs=[vmem, vmem, vmem],
        out_specs=vmem,
    )(x_all, state, w_slab)

    # Unpack to the PyTorch-facing layouts.
    out = packed[0:1, :].T                                            # (B, 1)
    h_n = packed[1:1 + LAYERS * HIDDEN, :].reshape(
        LAYERS, HIDDEN, B).transpose(0, 2, 1)                         # (L, B, H)
    c_n = packed[1 + LAYERS * HIDDEN:, :].reshape(
        LAYERS, HIDDEN, B).transpose(0, 2, 1)                         # (L, B, H)
    return out, (h_n, c_n)


def mgat_reference(x, h0, c0, p):
    """Pure-JAX reference mirroring torch.nn.LSTM + Flatten + Linear."""
    h = [h0[0], h0[1]]
    c = [c0[0], c0[1]]
    W_ih = [p["w_ih0"], p["w_ih1"]]
    W_hh = [p["w_hh0"], p["w_hh1"]]
    b_ih = [p["b_ih0"], p["b_ih1"]]
    b_hh = [p["b_hh0"], p["b_hh1"]]
    outs = []
    for t in range(SEQ):
        inp = x[:, t, :]
        for l in range(LAYERS):
            gates = inp @ W_ih[l].T + h[l] @ W_hh[l].T + b_ih[l] + b_hh[l]
            i, f, g, o = jnp.split(gates, 4, axis=-1)
            i = jax.nn.sigmoid(i)
            f = jax.nn.sigmoid(f)
            g = jnp.tanh(g)
            o = jax.nn.sigmoid(o)
            c[l] = f * c[l] + i * g
            h[l] = o * jnp.tanh(c[l])
            inp = h[l]
        outs.append(h[-1])
    lstm_out = jnp.stack(outs, axis=1)                       # (B, T, H)
    flat = lstm_out.reshape(x.shape[0], -1)                  # (B, T*H)
    out = flat @ p["w_lin"].T + p["b_lin"]
    return out, (jnp.stack(h), jnp.stack(c))


def make_params(key):
    """Deterministic params with PyTorch-default uniform(-1/sqrt(H), 1/sqrt(H)) style init."""
    ks = jax.random.split(key, 10)
    k_lstm = 1.0 / np.sqrt(HIDDEN)
    k_lin = 1.0 / np.sqrt(LIN_IN)
    u = lambda k, shape, bound: jax.random.uniform(
        k, shape, jnp.float32, minval=-bound, maxval=bound)
    return {
        # layer 0
        "w_ih0": u(ks[0], (4 * HIDDEN, INPUT), k_lstm),
        "w_hh0": u(ks[1], (4 * HIDDEN, HIDDEN), k_lstm),
        "b_ih0": u(ks[2], (4 * HIDDEN,), k_lstm),
        "b_hh0": u(ks[3], (4 * HIDDEN,), k_lstm),
        # layer 1
        "w_ih1": u(ks[4], (4 * HIDDEN, HIDDEN), k_lstm),
        "w_hh1": u(ks[5], (4 * HIDDEN, HIDDEN), k_lstm),
        "b_ih1": u(ks[6], (4 * HIDDEN,), k_lstm),
        "b_hh1": u(ks[7], (4 * HIDDEN,), k_lstm),
        # Linear(10, 1)
        "w_lin": u(ks[8], (LIN_OUT, LIN_IN), k_lin),
        "b_lin": u(ks[9], (LIN_OUT,), k_lin),
    }


if __name__ == "__main__":
    key = jax.random.PRNGKey(0)
    kx, kh, kc, kp = jax.random.split(key, 4)

    B = 2
    x = jax.random.normal(kx, (B, SEQ, INPUT), jnp.float32)
    h0 = jax.random.normal(kh, (LAYERS, B, HIDDEN), jnp.float32)
    c0 = jax.random.normal(kc, (LAYERS, B, HIDDEN), jnp.float32)
    params = make_params(kp)

    # Parameter views are packed ONCE here (not per forward call).
    w_slab = pack_kernel_params(params)
    forward = jax.jit(mgat_forward)

    out, (h_n, c_n) = forward(x, h0, c0, w_slab)
    jax.block_until_ready((out, h_n, c_n))

    # Self-check against a pure-JAX reference of the same math.
    ref_out, (ref_h, ref_c) = mgat_reference(x, h0, c0, params)
    assert np.allclose(np.asarray(out), np.asarray(ref_out), atol=1e-5), "out mismatch"
    assert np.allclose(np.asarray(h_n), np.asarray(ref_h), atol=1e-5), "h_n mismatch"
    assert np.allclose(np.asarray(c_n), np.asarray(ref_c), atol=1e-5), "c_n mismatch"

    print("KERNEL_OK")
</pallas_src>

<mosaic_0001>
module attributes {stable_mosaic.version = 11 : i64} {
  func.func @_mgat_kernel(%arg0: memref<10x10xf32, #tpu.memory_space<vmem>>, %arg1: memref<8x2xf32, #tpu.memory_space<vmem>>, %arg2: memref<8x24xf32, #tpu.memory_space<vmem>>, %arg3: memref<9x2xf32, #tpu.memory_space<vmem>>) attributes {dimension_semantics = [], scalar_prefetch = 0 : i64, scratch_operands = 0 : i64, tpu.core_type = #tpu.core_type<tc>} {
    %c0 = arith.constant 0 : index
    %c0_0 = arith.constant 0 : index
    %0 = vector.load %arg2[%c0, %c0_0] : memref<8x24xf32, #tpu.memory_space<vmem>>, vector<8x24xf32>
    %1 = vector.extract_strided_slice %0 {offsets = [0, 0], sizes = [8, 10], strides = [1, 1]} : vector<8x24xf32> to vector<8x10xf32>
    %2 = vector.extract_strided_slice %0 {offsets = [0, 10], sizes = [8, 2], strides = [1, 1]} : vector<8x24xf32> to vector<8x2xf32>
    %3 = vector.extract_strided_slice %0 {offsets = [0, 12], sizes = [8, 2], strides = [1, 1]} : vector<8x24xf32> to vector<8x2xf32>
    %4 = vector.extract_strided_slice %0 {offsets = [0, 14], sizes = [8, 2], strides = [1, 1]} : vector<8x24xf32> to vector<8x2xf32>
    %5 = vector.extract_strided_slice %0 {offsets = [0, 16], sizes = [8, 1], strides = [1, 1]} : vector<8x24xf32> to vector<8x1xf32>
    %6 = vector.extract_strided_slice %0 {offsets = [0, 17], sizes = [8, 1], strides = [1, 1]} : vector<8x24xf32> to vector<8x1xf32>
    %7 = vector.extract_strided_slice %0 {offsets = [0, 18], sizes = [2, 5], strides = [1, 1]} : vector<8x24xf32> to vector<2x5xf32>
    %8 = vector.extract_strided_slice %0 {offsets = [0, 23], sizes = [1, 1], strides = [1, 1]} : vector<8x24xf32> to vector<1x1xf32>
    %c0_1 = arith.constant 0 : index
    %c0_2 = arith.constant 0 : index
    %9 = vector.load %arg0[%c0_1, %c0_2] : memref<10x10xf32, #tpu.memory_space<vmem>>, vector<10x10xf32>
    %10 = vector.extract_strided_slice %1 {offsets = [0, 0], sizes = [8, 1], strides = [1, 1]} : vector<8x10xf32> to vector<8x1xf32>
    %11 = vector.extract_strided_slice %9 {offsets = [0, 0], sizes = [1, 10], strides = [1, 1]} : vector<10x10xf32> to vector<1x10xf32>
    %12 = vector.broadcast %10 : vector<8x1xf32> to vector<8x10xf32>
    %13 = vector.broadcast %11 : vector<1x10xf32> to vector<8x10xf32>
    %14 = arith.mulf %12, %13 : vector<8x10xf32>
    %15 = vector.broadcast %5 : vector<8x1xf32> to vector<8x10xf32>
    %16 = arith.addf %15, %14 : vector<8x10xf32>
    %17 = vector.extract_strided_slice %1 {offsets = [0, 1], sizes = [8, 1], strides = [1, 1]} : vector<8x10xf32> to vector<8x1xf32>
    %18 = vector.extract_strided_slice %9 {offsets = [1, 0], sizes = [1, 10], strides = [1, 1]} : vector<10x10xf32> to vector<1x10xf32>
    %19 = vector.broadcast %17 : vector<8x1xf32> to vector<8x10xf32>
    %20 = vector.broadcast %18 : vector<1x10xf32> to vector<8x10xf32>
    %21 = arith.mulf %19, %20 : vector<8x10xf32>
    %22 = arith.addf %16, %21 : vector<8x10xf32>
    %23 = vector.extract_strided_slice %1 {offsets = [0, 2], sizes = [8, 1], strides = [1, 1]} : vector<8x10xf32> to vector<8x1xf32>
    %24 = vector.extract_strided_slice %9 {offsets = [2, 0], sizes = [1, 10], strides = [1, 1]} : vector<10x10xf32> to vector<1x10xf32>
    %25 = vector.broadcast %23 : vector<8x1xf32> to vector<8x10xf32>
    %26 = vector.broadcast %24 : vector<1x10xf32> to vector<8x10xf32>
    %27 = arith.mulf %25, %26 : vector<8x10xf32>
    %28 = arith.addf %22, %27 : vector<8x10xf32>
    %29 = vector.extract_strided_slice %1 {offsets = [0, 3], sizes = [8, 1], strides = [1, 1]} : vector<8x10xf32> to vector<8x1xf32>
    %30 = vector.extract_strided_slice %9 {offsets = [3, 0], sizes = [1, 10], strides = [1, 1]} : vector<10x10xf32> to vector<1x10xf32>
    %31 = vector.broadcast %29 : vector<8x1xf32> to vector<8x10xf32>
    %32 = vector.broadcast %30 : vector<1x10xf32> to vector<8x10xf32>
    %33 = arith.mulf %31, %32 : vector<8x10xf32>
    %34 = arith.addf %28, %33 : vector<8x10xf32>
    %35 = vector.extract_strided_slice %1 {offsets = [0, 4], sizes = [8, 1], strides = [1, 1]} : vector<8x10xf32> to vector<8x1xf32>
    %36 = vector.extract_strided_slice %9 {offsets = [4, 0], sizes = [1, 10], strides = [1, 1]} : vector<10x10xf32> to vector<1x10xf32>
    %37 = vector.broadcast %35 : vector<8x1xf32> to vector<8x10xf32>
    %38 = vector.broadcast %36 : vector<1x10xf32> to vector<8x10xf32>
    %39 = arith.mulf %37, %38 : vector<8x10xf32>
    %40 = arith.addf %34, %39 : vector<8x10xf32>
    %41 = vector.extract_strided_slice %1 {offsets = [0, 5], sizes = [8, 1], strides = [1, 1]} : vector<8x10xf32> to vector<8x1xf32>
    %42 = vector.extract_strided_slice %9 {offsets = [5, 0], sizes = [1, 10], strides = [1, 1]} : vector<10x10xf32> to vector<1x10xf32>
    %43 = vector.broadcast %41 : vector<8x1xf32> to vector<8x10xf32>
    %44 = vector.broadcast %42 : vector<1x10xf32> to vector<8x10xf32>
    %45 = arith.mulf %43, %44 : vector<8x10xf32>
    %46 = arith.addf %40, %45 : vector<8x10xf32>
    %47 = vector.extract_strided_slice %1 {offsets = [0, 6], sizes = [8, 1], strides = [1, 1]} : vector<8x10xf32> to vector<8x1xf32>
    %48 = vector.extract_strided_slice %9 {offsets = [6, 0], sizes = [1, 10], strides = [1, 1]} : vector<10x10xf32> to vector<1x10xf32>
    %49 = vector.broadcast %47 : vector<8x1xf32> to vector<8x10xf32>
    %50 = vector.broadcast %48 : vector<1x10xf32> to vector<8x10xf32>
    %51 = arith.mulf %49, %50 : vector<8x10xf32>
    %52 = arith.addf %46, %51 : vector<8x10xf32>
    %53 = vector.extract_strided_slice %1 {offsets = [0, 7], sizes = [8, 1], strides = [1, 1]} : vector<8x10xf32> to vector<8x1xf32>
    %54 = vector.extract_strided_slice %9 {offsets = [7, 0], sizes = [1, 10], strides = [1, 1]} : vector<10x10xf32> to vector<1x10xf32>
    %55 = vector.broadcast %53 : vector<8x1xf32> to vector<8x10xf32>
    %56 = vector.broadcast %54 : vector<1x10xf32> to vector<8x10xf32>
    %57 = arith.mulf %55, %56 : vector<8x10xf32>
    %58 = arith.addf %52, %57 : vector<8x10xf32>
    %59 = vector.extract_strided_slice %1 {offsets = [0, 8], sizes = [8, 1], strides = [1, 1]} : vector<8x10xf32> to vector<8x1xf32>
    %60 = vector.extract_strided_slice %9 {offsets = [8, 0], sizes = [1, 10], strides = [1, 1]} : vector<10x10xf32> to vector<1x10xf32>
    %61 = vector.broadcast %59 : vector<8x1xf32> to vector<8x10xf32>
    %62 = vector.broadcast %60 : vector<1x10xf32> to vector<8x10xf32>
    %63 = arith.mulf %61, %62 : vector<8x10xf32>
    %64 = arith.addf %58, %63 : vector<8x10xf32>
    %65 = vector.extract_strided_slice %1 {offsets = [0, 9], sizes = [8, 1], strides = [1, 1]} : vector<8x10xf32> to vector<8x1xf32>
    %66 = vector.extract_strided_slice %9 {offsets = [9, 0], sizes = [1, 10], strides = [1, 1]} : vector<10x10xf32> to vector<1x10xf32>
    %67 = vector.broadcast %65 : vector<8x1xf32> to vector<8x10xf32>
    %68 = vector.broadcast %66 : vector<1x10xf32> to vector<8x10xf32>
    %69 = arith.mulf %67, %68 : vector<8x10xf32>
    %70 = arith.addf %64, %69 : vector<8x10xf32>
    %c0_3 = arith.constant 0 : index
    %c0_4 = arith.constant 0 : index
    %71 = vector.load %arg1[%c0_3, %c0_4] : memref<8x2xf32, #tpu.memory_space<vmem>>, vector<2x2xf32>
    %c2 = arith.constant 2 : index
    %c0_5 = arith.constant 0 : index
    %72 = vector.load %arg1[%c2, %c0_5] : memref<8x2xf32, #tpu.memory_space<vmem>>, vector<2x2xf32>
    %c4 = arith.constant 4 : index
    %c0_6 = arith.constant 0 : index
    %73 = vector.load %arg1[%c4, %c0_6] : memref<8x2xf32, #tpu.memory_space<vmem>>, vector<2x2xf32>
    %c6 = arith.constant 6 : index
    %c0_7 = arith.constant 0 : index
    %74 = vector.load %arg1[%c6, %c0_7] : memref<8x2xf32, #tpu.memory_space<vmem>>, vector<2x2xf32>
    %cst = arith.constant 0.000000e+00 : f32
    %75 = vector.broadcast %cst : f32 to vector<2x2xf32>
    %76 = vector.extract_strided_slice %70 {offsets = [0, 0], sizes = [8, 2], strides = [1, 1]} : vector<8x10xf32> to vector<8x2xf32>
    %77 = vector.extract_strided_slice %2 {offsets = [0, 0], sizes = [8, 1], strides = [1, 1]} : vector<8x2xf32> to vector<8x1xf32>
    %78 = vector.extract_strided_slice %71 {offsets = [0, 0], sizes = [1, 2], strides = [1, 1]} : vector<2x2xf32> to vector<1x2xf32>
    %79 = vector.broadcast %77 : vector<8x1xf32> to vector<8x2xf32>
    %80 = vector.broadcast %78 : vector<1x2xf32> to vector<8x2xf32>
    %81 = arith.mulf %79, %80 : vector<8x2xf32>
    %82 = vector.extract_strided_slice %2 {offsets = [0, 1], sizes = [8, 1], strides = [1, 1]} : vector<8x2xf32> to vector<8x1xf32>
    %83 = vector.extract_strided_slice %71 {offsets = [1, 0], sizes = [1, 2], strides = [1, 1]} : vector<2x2xf32> to vector<1x2xf32>
    %84 = vector.broadcast %82 : vector<8x1xf32> to vector<8x2xf32>
    %85 = vector.broadcast %83 : vector<1x2xf32> to vector<8x2xf32>
    %86 = arith.mulf %84, %85 : vector<8x2xf32>
    %87 = arith.addf %81, %86 : vector<8x2xf32>
    %88 = arith.addf %76, %87 : vector<8x2xf32>
    %cst_8 = arith.constant 5.000000e-01 : f32
    %89 = vector.broadcast %cst_8 : f32 to vector<8x2xf32>
    %90 = arith.mulf %89, %88 : vector<8x2xf32>
    %91 = math.tanh %90 : vector<8x2xf32>
    %cst_9 = arith.constant 5.000000e-01 : f32
    %92 = vector.broadcast %cst_9 : f32 to vector<8x2xf32>
    %93 = arith.mulf %92, %91 : vector<8x2xf32>
    %cst_10 = arith.constant 5.000000e-01 : f32
    %94 = vector.broadcast %cst_10 : f32 to vector<8x2xf32>
    %95 = arith.addf %94, %93 : vector<8x2xf32>
    %96 = math.tanh %88 : vector<8x2xf32>
    %97 = vector.extract_strided_slice %95 {offsets = [0, 0], sizes = [2, 2], strides = [1, 1]} : vector<8x2xf32> to vector<2x2xf32>
    %98 = vector.extract_strided_slice %95 {offsets = [2, 0], sizes = [2, 2], strides = [1, 1]} : vector<8x2xf32> to vector<2x2xf32>
    %99 = vector.extract_strided_slice %96 {offsets = [4, 0], sizes = [2, 2], strides = [1, 1]} : vector<8x2xf32> to vector<2x2xf32>
    %100 = vector.extract_strided_slice %95 {offsets = [6, 0], sizes = [2, 2], strides = [1, 1]} : vector<8x2xf32> to vector<2x2xf32>
    %101 = arith.mulf %98, %73 : vector<2x2xf32>
    %102 = arith.mulf %97, %99 : vector<2x2xf32>
    %103 = arith.addf %101, %102 : vector<2x2xf32>
    %104 = math.tanh %103 : vector<2x2xf32>
    %105 = arith.mulf %100, %104 : vector<2x2xf32>
    %106 = vector.extract_strided_slice %3 {offsets = [0, 0], sizes = [8, 1], strides = [1, 1]} : vector<8x2xf32> to vector<8x1xf32>
    %107 = vector.extract_strided_slice %105 {offsets = [0, 0], sizes = [1, 2], strides = [1, 1]} : vector<2x2xf32> to vector<1x2xf32>
    %108 = vector.broadcast %106 : vector<8x1xf32> to vector<8x2xf32>
    %109 = vector.broadcast %107 : vector<1x2xf32> to vector<8x2xf32>
    %110 = arith.mulf %108, %109 : vector<8x2xf32>
    %111 = vector.extract_strided_slice %3 {offsets = [0, 1], sizes = [8, 1], strides = [1, 1]} : vector<8x2xf32> to vector<8x1xf32>
    %112 = vector.extract_strided_slice %105 {offsets = [1, 0], sizes = [1, 2], strides = [1, 1]} : vector<2x2xf32> to vector<1x2xf32>
    %113 = vector.broadcast %111 : vector<8x1xf32> to vector<8x2xf32>
    %114 = vector.broadcast %112 : vector<1x2xf32> to vector<8x2xf32>
    %115 = arith.mulf %113, %114 : vector<8x2xf32>
    %116 = arith.addf %110, %115 : vector<8x2xf32>
    %117 = vector.broadcast %6 : vector<8x1xf32> to vector<8x2xf32>
    %118 = arith.addf %117, %116 : vector<8x2xf32>
    %119 = vector.extract_strided_slice %4 {offsets = [0, 0], sizes = [8, 1], strides = [1, 1]} : vector<8x2xf32> to vector<8x1xf32>
    %120 = vector.extract_strided_slice %72 {offsets = [0, 0], sizes = [1, 2], strides = [1, 1]} : vector<2x2xf32> to vector<1x2xf32>
    %121 = vector.broadcast %119 : vector<8x1xf32> to vector<8x2xf32>
    %122 = vector.broadcast %120 : vector<1x2xf32> to vector<8x2xf32>
    %123 = arith.mulf %121, %122 : vector<8x2xf32>
    %124 = vector.extract_strided_slice %4 {offsets = [0, 1], sizes = [8, 1], strides = [1, 1]} : vector<8x2xf32> to vector<8x1xf32>
    %125 = vector.extract_strided_slice %72 {offsets = [1, 0], sizes = [1, 2], strides = [1, 1]} : vector<2x2xf32> to vector<1x2xf32>
    %126 = vector.broadcast %124 : vector<8x1xf32> to vector<8x2xf32>
    %127 = vector.broadcast %125 : vector<1x2xf32> to vector<8x2xf32>
    %128 = arith.mulf %126, %127 : vector<8x2xf32>
    %129 = arith.addf %123, %128 : vector<8x2xf32>
    %130 = arith.addf %118, %129 : vector<8x2xf32>
    %cst_11 = arith.constant 5.000000e-01 : f32
    %131 = vector.broadcast %cst_11 : f32 to vector<8x2xf32>
    %132 = arith.mulf %131, %130 : vector<8x2xf32>
    %133 = math.tanh %132 : vector<8x2xf32>
    %cst_12 = arith.constant 5.000000e-01 : f32
    %134 = vector.broadcast %cst_12 : f32 to vector<8x2xf32>
    %135 = arith.mulf %134, %133 : vector<8x2xf32>
    %cst_13 = arith.constant 5.000000e-01 : f32
    %136 = vector.broadcast %cst_13 : f32 to vector<8x2xf32>
    %137 = arith.addf %136, %135 : vector<8x2xf32>
    %138 = math.tanh %130 : vector<8x2xf32>
    %139 = vector.extract_strided_slice %137 {offsets = [0, 0], sizes = [2, 2], strides = [1, 1]} : vector<8x2xf32> to vector<2x2xf32>
    %140 = vector.extract_strided_slice %137 {offsets = [2, 0], sizes = [2, 2], strides = [1, 1]} : vector<8x2xf32> to vector<2x2xf32>
    %141 = vector.extract_strided_slice %138 {offsets = [4, 0], sizes = [2, 2], strides = [1, 1]} : vector<8x2xf32> to vector<2x2xf32>
    %142 = vector.extract_strided_slice %137 {offsets = [6, 0], sizes = [2, 2], strides = [1, 1]} : vector<8x2xf32> to vector<2x2xf32>
    %143 = arith.mulf %140, %74 : vector<2x2xf32>
    %144 = arith.mulf %139, %141 : vector<2x2xf32>
    %145 = arith.addf %143, %144 : vector<2x2xf32>
    %146 = math.tanh %145 : vector<2x2xf32>
    %147 = arith.mulf %142, %146 : vector<2x2xf32>
    %148 = vector.extract_strided_slice %7 {offsets = [0, 0], sizes = [2, 1], strides = [1, 1]} : vector<2x5xf32> to vector<2x1xf32>
    %149 = vector.broadcast %148 : vector<2x1xf32> to vector<2x2xf32>
    %150 = arith.mulf %147, %149 : vector<2x2xf32>
    %151 = arith.addf %75, %150 : vector<2x2xf32>
    %152 = vector.extract_strided_slice %70 {offsets = [0, 2], sizes = [8, 2], strides = [1, 1]} : vector<8x10xf32> to vector<8x2xf32>
    %153 = vector.extract_strided_slice %2 {offsets = [0, 0], sizes = [8, 1], strides = [1, 1]} : vector<8x2xf32> to vector<8x1xf32>
    %154 = vector.extract_strided_slice %105 {offsets = [0, 0], sizes = [1, 2], strides = [1, 1]} : vector<2x2xf32> to vector<1x2xf32>
    %155 = vector.broadcast %153 : vector<8x1xf32> to vector<8x2xf32>
    %156 = vector.broadcast %154 : vector<1x2xf32> to vector<8x2xf32>
    %157 = arith.mulf %155, %156 : vector<8x2xf32>
    %158 = vector.extract_strided_slice %2 {offsets = [0, 1], sizes = [8, 1], strides = [1, 1]} : vector<8x2xf32> to vector<8x1xf32>
    %159 = vector.extract_strided_slice %105 {offsets = [1, 0], sizes = [1, 2], strides = [1, 1]} : vector<2x2xf32> to vector<1x2xf32>
    %160 = vector.broadcast %158 : vector<8x1xf32> to vector<8x2xf32>
    %161 = vector.broadcast %159 : vector<1x2xf32> to vector<8x2xf32>
    %162 = arith.mulf %160, %161 : vector<8x2xf32>
    %163 = arith.addf %157, %162 : vector<8x2xf32>
    %164 = arith.addf %152, %163 : vector<8x2xf32>
    %cst_14 = arith.constant 5.000000e-01 : f32
    %165 = vector.broadcast %cst_14 : f32 to vector<8x2xf32>
    %166 = arith.mulf %165, %164 : vector<8x2xf32>
    %167 = math.tanh %166 : vector<8x2xf32>
    %cst_15 = arith.constant 5.000000e-01 : f32
    %168 = vector.broadcast %cst_15 : f32 to vector<8x2xf32>
    %169 = arith.mulf %168, %167 : vector<8x2xf32>
    %cst_16 = arith.constant 5.000000e-01 : f32
    %170 = vector.broadcast %cst_16 : f32 to vector<8x2xf32>
    %171 = arith.addf %170, %169 : vector<8x2xf32>
    %172 = math.tanh %164 : vector<8x2xf32>
    %173 = vector.extract_strided_slice %171 {offsets = [0, 0], sizes = [2, 2], strides = [1, 1]} : vector<8x2xf32> to vector<2x2xf32>
    %174 = vector.extract_strided_slice %171 {offsets = [2, 0], sizes = [2, 2], strides = [1, 1]} : vector<8x2xf32> to vector<2x2xf32>
    %175 = vector.extract_strided_slice %172 {offsets = [4, 0], sizes = [2, 2], strides = [1, 1]} : vector<8x2xf32> to vector<2x2xf32>
    %176 = vector.extract_strided_slice %171 {offsets = [6, 0], sizes = [2, 2], strides = [1, 1]} : vector<8x2xf32> to vector<2x2xf32>
    %177 = arith.mulf %174, %103 : vector<2x2xf32>
    %178 = arith.mulf %173, %175 : vector<2x2xf32>
    %179 = arith.addf %177, %178 : vector<2x2xf32>
    %180 = math.tanh %179 : vector<2x2xf32>
    %181 = arith.mulf %176, %180 : vector<2x2xf32>
    %182 = vector.extract_strided_slice %3 {offsets = [0, 0], sizes = [8, 1], strides = [1, 1]} : vector<8x2xf32> to vector<8x1xf32>
    %183 = vector.extract_strided_slice %181 {offsets = [0, 0], sizes = [1, 2], strides = [1, 1]} : vector<2x2xf32> to vector<1x2xf32>
    %184 = vector.broadcast %182 : vector<8x1xf32> to vector<8x2xf32>
    %185 = vector.broadcast %183 : vector<1x2xf32> to vector<8x2xf32>
    %186 = arith.mulf %184, %185 : vector<8x2xf32>
    %187 = vector.extract_strided_slice %3 {offsets = [0, 1], sizes = [8, 1], strides = [1, 1]} : vector<8x2xf32> to vector<8x1xf32>
    %188 = vector.extract_strided_slice %181 {offsets = [1, 0], sizes = [1, 2], strides = [1, 1]} : vector<2x2xf32> to vector<1x2xf32>
    %189 = vector.broadcast %187 : vector<8x1xf32> to vector<8x2xf32>
    %190 = vector.broadcast %188 : vector<1x2xf32> to vector<8x2xf32>
    %191 = arith.mulf %189, %190 : vector<8x2xf32>
    %192 = arith.addf %186, %191 : vector<8x2xf32>
    %193 = vector.broadcast %6 : vector<8x1xf32> to vector<8x2xf32>
    %194 = arith.addf %193, %192 : vector<8x2xf32>
    %195 = vector.extract_strided_slice %4 {offsets = [0, 0], sizes = [8, 1], strides = [1, 1]} : vector<8x2xf32> to vector<8x1xf32>
    %196 = vector.extract_strided_slice %147 {offsets = [0, 0], sizes = [1, 2], strides = [1, 1]} : vector<2x2xf32> to vector<1x2xf32>
    %197 = vector.broadcast %195 : vector<8x1xf32> to vector<8x2xf32>
    %198 = vector.broadcast %196 : vector<1x2xf32> to vector<8x2xf32>
    %199 = arith.mulf %197, %198 : vector<8x2xf32>
    %200 = vector.extract_strided_slice %4 {offsets = [0, 1], sizes = [8, 1], strides = [1, 1]} : vector<8x2xf32> to vector<8x1xf32>
    %201 = vector.extract_strided_slice %147 {offsets = [1, 0], sizes = [1, 2], strides = [1, 1]} : vector<2x2xf32> to vector<1x2xf32>
    %202 = vector.broadcast %200 : vector<8x1xf32> to vector<8x2xf32>
    %203 = vector.broadcast %201 : vector<1x2xf32> to vector<8x2xf32>
    %204 = arith.mulf %202, %203 : vector<8x2xf32>
    %205 = arith.addf %199, %204 : vector<8x2xf32>
    %206 = arith.addf %194, %205 : vector<8x2xf32>
    %cst_17 = arith.constant 5.000000e-01 : f32
    %207 = vector.broadcast %cst_17 : f32 to vector<8x2xf32>
    %208 = arith.mulf %207, %206 : vector<8x2xf32>
    %209 = math.tanh %208 : vector<8x2xf32>
    %cst_18 = arith.constant 5.000000e-01 : f32
    %210 = vector.broadcast %cst_18 : f32 to vector<8x2xf32>
    %211 = arith.mulf %210, %209 : vector<8x2xf32>
    %cst_19 = arith.constant 5.000000e-01 : f32
    %212 = vector.broadcast %cst_19 : f32 to vector<8x2xf32>
    %213 = arith.addf %212, %211 : vector<8x2xf32>
    %214 = math.tanh %206 : vector<8x2xf32>
    %215 = vector.extract_strided_slice %213 {offsets = [0, 0], sizes = [2, 2], strides = [1, 1]} : vector<8x2xf32> to vector<2x2xf32>
    %216 = vector.extract_strided_slice %213 {offsets = [2, 0], sizes = [2, 2], strides = [1, 1]} : vector<8x2xf32> to vector<2x2xf32>
    %217 = vector.extract_strided_slice %214 {offsets = [4, 0], sizes = [2, 2], strides = [1, 1]} : vector<8x2xf32> to vector<2x2xf32>
    %218 = vector.extract_strided_slice %213 {offsets = [6, 0], sizes = [2, 2], strides = [1, 1]} : vector<8x2xf32> to vector<2x2xf32>
    %219 = arith.mulf %216, %145 : vector<2x2xf32>
    %220 = arith.mulf %215, %217 : vector<2x2xf32>
    %221 = arith.addf %219, %220 : vector<2x2xf32>
    %222 = math.tanh %221 : vector<2x2xf32>
    %223 = arith.mulf %218, %222 : vector<2x2xf32>
    %224 = vector.extract_strided_slice %7 {offsets = [0, 1], sizes = [2, 1], strides = [1, 1]} : vector<2x5xf32> to vector<2x1xf32>
    %225 = vector.broadcast %224 : vector<2x1xf32> to vector<2x2xf32>
    %226 = arith.mulf %223, %225 : vector<2x2xf32>
    %227 = arith.addf %151, %226 : vector<2x2xf32>
    %228 = vector.extract_strided_slice %70 {offsets = [0, 4], sizes = [8, 2], strides = [1, 1]} : vector<8x10xf32> to vector<8x2xf32>
    %229 = vector.extract_strided_slice %2 {offsets = [0, 0], sizes = [8, 1], strides = [1, 1]} : vector<8x2xf32> to vector<8x1xf32>
    %230 = vector.extract_strided_slice %181 {offsets = [0, 0], sizes = [1, 2], strides = [1, 1]} : vector<2x2xf32> to vector<1x2xf32>
    %231 = vector.broadcast %229 : vector<8x1xf32> to vector<8x2xf32>
    %232 = vector.broadcast %230 : vector<1x2xf32> to vector<8x2xf32>
    %233 = arith.mulf %231, %232 : vector<8x2xf32>
    %234 = vector.extract_strided_slice %2 {offsets = [0, 1], sizes = [8, 1], strides = [1, 1]} : vector<8x2xf32> to vector<8x1xf32>
    %235 = vector.extract_strided_slice %181 {offsets = [1, 0], sizes = [1, 2], strides = [1, 1]} : vector<2x2xf32> to vector<1x2xf32>
    %236 = vector.broadcast %234 : vector<8x1xf32> to vector<8x2xf32>
    %237 = vector.broadcast %235 : vector<1x2xf32> to vector<8x2xf32>
    %238 = arith.mulf %236, %237 : vector<8x2xf32>
    %239 = arith.addf %233, %238 : vector<8x2xf32>
    %240 = arith.addf %228, %239 : vector<8x2xf32>
    %cst_20 = arith.constant 5.000000e-01 : f32
    %241 = vector.broadcast %cst_20 : f32 to vector<8x2xf32>
    %242 = arith.mulf %241, %240 : vector<8x2xf32>
    %243 = math.tanh %242 : vector<8x2xf32>
    %cst_21 = arith.constant 5.000000e-01 : f32
    %244 = vector.broadcast %cst_21 : f32 to vector<8x2xf32>
    %245 = arith.mulf %244, %243 : vector<8x2xf32>
    %cst_22 = arith.constant 5.000000e-01 : f32
    %246 = vector.broadcast %cst_22 : f32 to vector<8x2xf32>
    %247 = arith.addf %246, %245 : vector<8x2xf32>
    %248 = math.tanh %240 : vector<8x2xf32>
    %249 = vector.extract_strided_slice %247 {offsets = [0, 0], sizes = [2, 2], strides = [1, 1]} : vector<8x2xf32> to vector<2x2xf32>
    %250 = vector.extract_strided_slice %247 {offsets = [2, 0], sizes = [2, 2], strides = [1, 1]} : vector<8x2xf32> to vector<2x2xf32>
    %251 = vector.extract_strided_slice %248 {offsets = [4, 0], sizes = [2, 2], strides = [1, 1]} : vector<8x2xf32> to vector<2x2xf32>
    %252 = vector.extract_strided_slice %247 {offsets = [6, 0], sizes = [2, 2], strides = [1, 1]} : vector<8x2xf32> to vector<2x2xf32>
    %253 = arith.mulf %250, %179 : vector<2x2xf32>
    %254 = arith.mulf %249, %251 : vector<2x2xf32>
    %255 = arith.addf %253, %254 : vector<2x2xf32>
    %256 = math.tanh %255 : vector<2x2xf32>
    %257 = arith.mulf %252, %256 : vector<2x2xf32>
    %258 = vector.extract_strided_slice %3 {offsets = [0, 0], sizes = [8, 1], strides = [1, 1]} : vector<8x2xf32> to vector<8x1xf32>
    %259 = vector.extract_strided_slice %257 {offsets = [0, 0], sizes = [1, 2], strides = [1, 1]} : vector<2x2xf32> to vector<1x2xf32>
    %260 = vector.broadcast %258 : vector<8x1xf32> to vector<8x2xf32>
    %261 = vector.broadcast %259 : vector<1x2xf32> to vector<8x2xf32>
    %262 = arith.mulf %260, %261 : vector<8x2xf32>
    %263 = vector.extract_strided_slice %3 {offsets = [0, 1], sizes = [8, 1], strides = [1, 1]} : vector<8x2xf32> to vector<8x1xf32>
    %264 = vector.extract_strided_slice %257 {offsets = [1, 0], sizes = [1, 2], strides = [1, 1]} : vector<2x2xf32> to vector<1x2xf32>
    %265 = vector.broadcast %263 : vector<8x1xf32> to vector<8x2xf32>
    %266 = vector.broadcast %264 : vector<1x2xf32> to vector<8x2xf32>
    %267 = arith.mulf %265, %266 : vector<8x2xf32>
    %268 = arith.addf %262, %267 : vector<8x2xf32>
    %269 = vector.broadcast %6 : vector<8x1xf32> to vector<8x2xf32>
    %270 = arith.addf %269, %268 : vector<8x2xf32>
    %271 = vector.extract_strided_slice %4 {offsets = [0, 0], sizes = [8, 1], strides = [1, 1]} : vector<8x2xf32> to vector<8x1xf32>
    %272 = vector.extract_strided_slice %223 {offsets = [0, 0], sizes = [1, 2], strides = [1, 1]} : vector<2x2xf32> to vector<1x2xf32>
    %273 = vector.broadcast %271 : vector<8x1xf32> to vector<8x2xf32>
    %274 = vector.broadcast %272 : vector<1x2xf32> to vector<8x2xf32>
    %275 = arith.mulf %273, %274 : vector<8x2xf32>
    %276 = vector.extract_strided_slice %4 {offsets = [0, 1], sizes = [8, 1], strides = [1, 1]} : vector<8x2xf32> to vector<8x1xf32>
    %277 = vector.extract_strided_slice %223 {offsets = [1, 0], sizes = [1, 2], strides = [1, 1]} : vector<2x2xf32> to vector<1x2xf32>
    %278 = vector.broadcast %276 : vector<8x1xf32> to vector<8x2xf32>
    %279 = vector.broadcast %277 : vector<1x2xf32> to vector<8x2xf32>
    %280 = arith.mulf %278, %279 : vector<8x2xf32>
    %281 = arith.addf %275, %280 : vector<8x2xf32>
    %282 = arith.addf %270, %281 : vector<8x2xf32>
    %cst_23 = arith.constant 5.000000e-01 : f32
    %283 = vector.broadcast %cst_23 : f32 to vector<8x2xf32>
    %284 = arith.mulf %283, %282 : vector<8x2xf32>
    %285 = math.tanh %284 : vector<8x2xf32>
    %cst_24 = arith.constant 5.000000e-01 : f32
    %286 = vector.broadcast %cst_24 : f32 to vector<8x2xf32>
    %287 = arith.mulf %286, %285 : vector<8x2xf32>
    %cst_25 = arith.constant 5.000000e-01 : f32
    %288 = vector.broadcast %cst_25 : f32 to vector<8x2xf32>
    %289 = arith.addf %288, %287 : vector<8x2xf32>
    %290 = math.tanh %282 : vector<8x2xf32>
    %291 = vector.extract_strided_slice %289 {offsets = [0, 0], sizes = [2, 2], strides = [1, 1]} : vector<8x2xf32> to vector<2x2xf32>
    %292 = vector.extract_strided_slice %289 {offsets = [2, 0], sizes = [2, 2], strides = [1, 1]} : vector<8x2xf32> to vector<2x2xf32>
    %293 = vector.extract_strided_slice %290 {offsets = [4, 0], sizes = [2, 2], strides = [1, 1]} : vector<8x2xf32> to vector<2x2xf32>
    %294 = vector.extract_strided_slice %289 {offsets = [6, 0], sizes = [2, 2], strides = [1, 1]} : vector<8x2xf32> to vector<2x2xf32>
    %295 = arith.mulf %292, %221 : vector<2x2xf32>
    %296 = arith.mulf %291, %293 : vector<2x2xf32>
    %297 = arith.addf %295, %296 : vector<2x2xf32>
    %298 = math.tanh %297 : vector<2x2xf32>
    %299 = arith.mulf %294, %298 : vector<2x2xf32>
    %300 = vector.extract_strided_slice %7 {offsets = [0, 2], sizes = [2, 1], strides = [1, 1]} : vector<2x5xf32> to vector<2x1xf32>
    %301 = vector.broadcast %300 : vector<2x1xf32> to vector<2x2xf32>
    %302 = arith.mulf %299, %301 : vector<2x2xf32>
    %303 = arith.addf %227, %302 : vector<2x2xf32>
    %304 = vector.extract_strided_slice %70 {offsets = [0, 6], sizes = [8, 2], strides = [1, 1]} : vector<8x10xf32> to vector<8x2xf32>
    %305 = vector.extract_strided_slice %2 {offsets = [0, 0], sizes = [8, 1], strides = [1, 1]} : vector<8x2xf32> to vector<8x1xf32>
    %306 = vector.extract_strided_slice %257 {offsets = [0, 0], sizes = [1, 2], strides = [1, 1]} : vector<2x2xf32> to vector<1x2xf32>
    %307 = vector.broadcast %305 : vector<8x1xf32> to vector<8x2xf32>
    %308 = vector.broadcast %306 : vector<1x2xf32> to vector<8x2xf32>
    %309 = arith.mulf %307, %308 : vector<8x2xf32>
    %310 = vector.extract_strided_slice %2 {offsets = [0, 1], sizes = [8, 1], strides = [1, 1]} : vector<8x2xf32> to vector<8x1xf32>
    %311 = vector.extract_strided_slice %257 {offsets = [1, 0], sizes = [1, 2], strides = [1, 1]} : vector<2x2xf32> to vector<1x2xf32>
    %312 = vector.broadcast %310 : vector<8x1xf32> to vector<8x2xf32>
    %313 = vector.broadcast %311 : vector<1x2xf32> to vector<8x2xf32>
    %314 = arith.mulf %312, %313 : vector<8x2xf32>
    %315 = arith.addf %309, %314 : vector<8x2xf32>
    %316 = arith.addf %304, %315 : vector<8x2xf32>
    %cst_26 = arith.constant 5.000000e-01 : f32
    %317 = vector.broadcast %cst_26 : f32 to vector<8x2xf32>
    %318 = arith.mulf %317, %316 : vector<8x2xf32>
    %319 = math.tanh %318 : vector<8x2xf32>
    %cst_27 = arith.constant 5.000000e-01 : f32
    %320 = vector.broadcast %cst_27 : f32 to vector<8x2xf32>
    %321 = arith.mulf %320, %319 : vector<8x2xf32>
    %cst_28 = arith.constant 5.000000e-01 : f32
    %322 = vector.broadcast %cst_28 : f32 to vector<8x2xf32>
    %323 = arith.addf %322, %321 : vector<8x2xf32>
    %324 = math.tanh %316 : vector<8x2xf32>
    %325 = vector.extract_strided_slice %323 {offsets = [0, 0], sizes = [2, 2], strides = [1, 1]} : vector<8x2xf32> to vector<2x2xf32>
    %326 = vector.extract_strided_slice %323 {offsets = [2, 0], sizes = [2, 2], strides = [1, 1]} : vector<8x2xf32> to vector<2x2xf32>
    %327 = vector.extract_strided_slice %324 {offsets = [4, 0], sizes = [2, 2], strides = [1, 1]} : vector<8x2xf32> to vector<2x2xf32>
    %328 = vector.extract_strided_slice %323 {offsets = [6, 0], sizes = [2, 2], strides = [1, 1]} : vector<8x2xf32> to vector<2x2xf32>
    %329 = arith.mulf %326, %255 : vector<2x2xf32>
    %330 = arith.mulf %325, %327 : vector<2x2xf32>
    %331 = arith.addf %329, %330 : vector<2x2xf32>
    %332 = math.tanh %331 : vector<2x2xf32>
    %333 = arith.mulf %328, %332 : vector<2x2xf32>
    %334 = vector.extract_strided_slice %3 {offsets = [0, 0], sizes = [8, 1], strides = [1, 1]} : vector<8x2xf32> to vector<8x1xf32>
    %335 = vector.extract_strided_slice %333 {offsets = [0, 0], sizes = [1, 2], strides = [1, 1]} : vector<2x2xf32> to vector<1x2xf32>
    %336 = vector.broadcast %334 : vector<8x1xf32> to vector<8x2xf32>
    %337 = vector.broadcast %335 : vector<1x2xf32> to vector<8x2xf32>
    %338 = arith.mulf %336, %337 : vector<8x2xf32>
    %339 = vector.extract_strided_slice %3 {offsets = [0, 1], sizes = [8, 1], strides = [1, 1]} : vector<8x2xf32> to vector<8x1xf32>
    %340 = vector.extract_strided_slice %333 {offsets = [1, 0], sizes = [1, 2], strides = [1, 1]} : vector<2x2xf32> to vector<1x2xf32>
    %341 = vector.broadcast %339 : vector<8x1xf32> to vector<8x2xf32>
    %342 = vector.broadcast %340 : vector<1x2xf32> to vector<8x2xf32>
    %343 = arith.mulf %341, %342 : vector<8x2xf32>
    %344 = arith.addf %338, %343 : vector<8x2xf32>
    %345 = vector.broadcast %6 : vector<8x1xf32> to vector<8x2xf32>
    %346 = arith.addf %345, %344 : vector<8x2xf32>
    %347 = vector.extract_strided_slice %4 {offsets = [0, 0], sizes = [8, 1], strides = [1, 1]} : vector<8x2xf32> to vector<8x1xf32>
    %348 = vector.extract_strided_slice %299 {offsets = [0, 0], sizes = [1, 2], strides = [1, 1]} : vector<2x2xf32> to vector<1x2xf32>
    %349 = vector.broadcast %347 : vector<8x1xf32> to vector<8x2xf32>
    %350 = vector.broadcast %348 : vector<1x2xf32> to vector<8x2xf32>
    %351 = arith.mulf %349, %350 : vector<8x2xf32>
    %352 = vector.extract_strided_slice %4 {offsets = [0, 1], sizes = [8, 1], strides = [1, 1]} : vector<8x2xf32> to vector<8x1xf32>
    %353 = vector.extract_strided_slice %299 {offsets = [1, 0], sizes = [1, 2], strides = [1, 1]} : vector<2x2xf32> to vector<1x2xf32>
    %354 = vector.broadcast %352 : vector<8x1xf32> to vector<8x2xf32>
    %355 = vector.broadcast %353 : vector<1x2xf32> to vector<8x2xf32>
    %356 = arith.mulf %354, %355 : vector<8x2xf32>
    %357 = arith.addf %351, %356 : vector<8x2xf32>
    %358 = arith.addf %346, %357 : vector<8x2xf32>
    %cst_29 = arith.constant 5.000000e-01 : f32
    %359 = vector.broadcast %cst_29 : f32 to vector<8x2xf32>
    %360 = arith.mulf %359, %358 : vector<8x2xf32>
    %361 = math.tanh %360 : vector<8x2xf32>
    %cst_30 = arith.constant 5.000000e-01 : f32
    %362 = vector.broadcast %cst_30 : f32 to vector<8x2xf32>
    %363 = arith.mulf %362, %361 : vector<8x2xf32>
    %cst_31 = arith.constant 5.000000e-01 : f32
    %364 = vector.broadcast %cst_31 : f32 to vector<8x2xf32>
    %365 = arith.addf %364, %363 : vector<8x2xf32>
    %366 = math.tanh %358 : vector<8x2xf32>
    %367 = vector.extract_strided_slice %365 {offsets = [0, 0], sizes = [2, 2], strides = [1, 1]} : vector<8x2xf32> to vector<2x2xf32>
    %368 = vector.extract_strided_slice %365 {offsets = [2, 0], sizes = [2, 2], strides = [1, 1]} : vector<8x2xf32> to vector<2x2xf32>
    %369 = vector.extract_strided_slice %366 {offsets = [4, 0], sizes = [2, 2], strides = [1, 1]} : vector<8x2xf32> to vector<2x2xf32>
    %370 = vector.extract_strided_slice %365 {offsets = [6, 0], sizes = [2, 2], strides = [1, 1]} : vector<8x2xf32> to vector<2x2xf32>
    %371 = arith.mulf %368, %297 : vector<2x2xf32>
    %372 = arith.mulf %367, %369 : vector<2x2xf32>
    %373 = arith.addf %371, %372 : vector<2x2xf32>
    %374 = math.tanh %373 : vector<2x2xf32>
    %375 = arith.mulf %370, %374 : vector<2x2xf32>
    %376 = vector.extract_strided_slice %7 {offsets = [0, 3], sizes = [2, 1], strides = [1, 1]} : vector<2x5xf32> to vector<2x1xf32>
    %377 = vector.broadcast %376 : vector<2x1xf32> to vector<2x2xf32>
    %378 = arith.mulf %375, %377 : vector<2x2xf32>
    %379 = arith.addf %303, %378 : vector<2x2xf32>
    %380 = vector.extract_strided_slice %70 {offsets = [0, 8], sizes = [8, 2], strides = [1, 1]} : vector<8x10xf32> to vector<8x2xf32>
    %381 = vector.extract_strided_slice %2 {offsets = [0, 0], sizes = [8, 1], strides = [1, 1]} : vector<8x2xf32> to vector<8x1xf32>
    %382 = vector.extract_strided_slice %333 {offsets = [0, 0], sizes = [1, 2], strides = [1, 1]} : vector<2x2xf32> to vector<1x2xf32>
    %383 = vector.broadcast %381 : vector<8x1xf32> to vector<8x2xf32>
    %384 = vector.broadcast %382 : vector<1x2xf32> to vector<8x2xf32>
    %385 = arith.mulf %383, %384 : vector<8x2xf32>
    %386 = vector.extract_strided_slice %2 {offsets = [0, 1], sizes = [8, 1], strides = [1, 1]} : vector<8x2xf32> to vector<8x1xf32>
    %387 = vector.extract_strided_slice %333 {offsets = [1, 0], sizes = [1, 2], strides = [1, 1]} : vector<2x2xf32> to vector<1x2xf32>
    %388 = vector.broadcast %386 : vector<8x1xf32> to vector<8x2xf32>
    %389 = vector.broadcast %387 : vector<1x2xf32> to vector<8x2xf32>
    %390 = arith.mulf %388, %389 : vector<8x2xf32>
    %391 = arith.addf %385, %390 : vector<8x2xf32>
    %392 = arith.addf %380, %391 : vector<8x2xf32>
    %cst_32 = arith.constant 5.000000e-01 : f32
    %393 = vector.broadcast %cst_32 : f32 to vector<8x2xf32>
    %394 = arith.mulf %393, %392 : vector<8x2xf32>
    %395 = math.tanh %394 : vector<8x2xf32>
    %cst_33 = arith.constant 5.000000e-01 : f32
    %396 = vector.broadcast %cst_33 : f32 to vector<8x2xf32>
    %397 = arith.mulf %396, %395 : vector<8x2xf32>
    %cst_34 = arith.constant 5.000000e-01 : f32
    %398 = vector.broadcast %cst_34 : f32 to vector<8x2xf32>
    %399 = arith.addf %398, %397 : vector<8x2xf32>
    %400 = math.tanh %392 : vector<8x2xf32>
    %401 = vector.extract_strided_slice %399 {offsets = [0, 0], sizes = [2, 2], strides = [1, 1]} : vector<8x2xf32> to vector<2x2xf32>
    %402 = vector.extract_strided_slice %399 {offsets = [2, 0], sizes = [2, 2], strides = [1, 1]} : vector<8x2xf32> to vector<2x2xf32>
    %403 = vector.extract_strided_slice %400 {offsets = [4, 0], sizes = [2, 2], strides = [1, 1]} : vector<8x2xf32> to vector<2x2xf32>
    %404 = vector.extract_strided_slice %399 {offsets = [6, 0], sizes = [2, 2], strides = [1, 1]} : vector<8x2xf32> to vector<2x2xf32>
    %405 = arith.mulf %402, %331 : vector<2x2xf32>
    %406 = arith.mulf %401, %403 : vector<2x2xf32>
    %407 = arith.addf %405, %406 : vector<2x2xf32>
    %408 = math.tanh %407 : vector<2x2xf32>
    %409 = arith.mulf %404, %408 : vector<2x2xf32>
    %410 = vector.extract_strided_slice %3 {offsets = [0, 0], sizes = [8, 1], strides = [1, 1]} : vector<8x2xf32> to vector<8x1xf32>
    %411 = vector.extract_strided_slice %409 {offsets = [0, 0], sizes = [1, 2], strides = [1, 1]} : vector<2x2xf32> to vector<1x2xf32>
    %412 = vector.broadcast %410 : vector<8x1xf32> to vector<8x2xf32>
    %413 = vector.broadcast %411 : vector<1x2xf32> to vector<8x2xf32>
    %414 = arith.mulf %412, %413 : vector<8x2xf32>
    %415 = vector.extract_strided_slice %3 {offsets = [0, 1], sizes = [8, 1], strides = [1, 1]} : vector<8x2xf32> to vector<8x1xf32>
    %416 = vector.extract_strided_slice %409 {offsets = [1, 0], sizes = [1, 2], strides = [1, 1]} : vector<2x2xf32> to vector<1x2xf32>
    %417 = vector.broadcast %415 : vector<8x1xf32> to vector<8x2xf32>
    %418 = vector.broadcast %416 : vector<1x2xf32> to vector<8x2xf32>
    %419 = arith.mulf %417, %418 : vector<8x2xf32>
    %420 = arith.addf %414, %419 : vector<8x2xf32>
    %421 = vector.broadcast %6 : vector<8x1xf32> to vector<8x2xf32>
    %422 = arith.addf %421, %420 : vector<8x2xf32>
    %423 = vector.extract_strided_slice %4 {offsets = [0, 0], sizes = [8, 1], strides = [1, 1]} : vector<8x2xf32> to vector<8x1xf32>
    %424 = vector.extract_strided_slice %375 {offsets = [0, 0], sizes = [1, 2], strides = [1, 1]} : vector<2x2xf32> to vector<1x2xf32>
    %425 = vector.broadcast %423 : vector<8x1xf32> to vector<8x2xf32>
    %426 = vector.broadcast %424 : vector<1x2xf32> to vector<8x2xf32>
    %427 = arith.mulf %425, %426 : vector<8x2xf32>
    %428 = vector.extract_strided_slice %4 {offsets = [0, 1], sizes = [8, 1], strides = [1, 1]} : vector<8x2xf32> to vector<8x1xf32>
    %429 = vector.extract_strided_slice %375 {offsets = [1, 0], sizes = [1, 2], strides = [1, 1]} : vector<2x2xf32> to vector<1x2xf32>
    %430 = vector.broadcast %428 : vector<8x1xf32> to vector<8x2xf32>
    %431 = vector.broadcast %429 : vector<1x2xf32> to vector<8x2xf32>
    %432 = arith.mulf %430, %431 : vector<8x2xf32>
    %433 = arith.addf %427, %432 : vector<8x2xf32>
    %434 = arith.addf %422, %433 : vector<8x2xf32>
    %cst_35 = arith.constant 5.000000e-01 : f32
    %435 = vector.broadcast %cst_35 : f32 to vector<8x2xf32>
    %436 = arith.mulf %435, %434 : vector<8x2xf32>
    %437 = math.tanh %436 : vector<8x2xf32>
    %cst_36 = arith.constant 5.000000e-01 : f32
    %438 = vector.broadcast %cst_36 : f32 to vector<8x2xf32>
    %439 = arith.mulf %438, %437 : vector<8x2xf32>
    %cst_37 = arith.constant 5.000000e-01 : f32
    %440 = vector.broadcast %cst_37 : f32 to vector<8x2xf32>
    %441 = arith.addf %440, %439 : vector<8x2xf32>
    %442 = math.tanh %434 : vector<8x2xf32>
    %443 = vector.extract_strided_slice %441 {offsets = [0, 0], sizes = [2, 2], strides = [1, 1]} : vector<8x2xf32> to vector<2x2xf32>
    %444 = vector.extract_strided_slice %441 {offsets = [2, 0], sizes = [2, 2], strides = [1, 1]} : vector<8x2xf32> to vector<2x2xf32>
    %445 = vector.extract_strided_slice %442 {offsets = [4, 0], sizes = [2, 2], strides = [1, 1]} : vector<8x2xf32> to vector<2x2xf32>
    %446 = vector.extract_strided_slice %441 {offsets = [6, 0], sizes = [2, 2], strides = [1, 1]} : vector<8x2xf32> to vector<2x2xf32>
    %447 = arith.mulf %444, %373 : vector<2x2xf32>
    %448 = arith.mulf %443, %445 : vector<2x2xf32>
    %449 = arith.addf %447, %448 : vector<2x2xf32>
    %450 = math.tanh %449 : vector<2x2xf32>
    %451 = arith.mulf %446, %450 : vector<2x2xf32>
    %452 = vector.extract_strided_slice %7 {offsets = [0, 4], sizes = [2, 1], strides = [1, 1]} : vector<2x5xf32> to vector<2x1xf32>
    %453 = vector.broadcast %452 : vector<2x1xf32> to vector<2x2xf32>
    %454 = arith.mulf %451, %453 : vector<2x2xf32>
    %455 = arith.addf %379, %454 : vector<2x2xf32>
    %456 = vector.extract_strided_slice %455 {offsets = [0, 0], sizes = [1, 2], strides = [1, 1]} : vector<2x2xf32> to vector<1x2xf32>
    %457 = vector.extract_strided_slice %455 {offsets = [1, 0], sizes = [1, 2], strides = [1, 1]} : vector<2x2xf32> to vector<1x2xf32>
    %458 = arith.addf %456, %457 : vector<1x2xf32>
    %459 = vector.broadcast %8 : vector<1x1xf32> to vector<1x2xf32>
    %460 = arith.addf %458, %459 : vector<1x2xf32>
    %c0_38 = arith.constant 0 : index
    %c0_39 = arith.constant 0 : index
    %461 = vector.load %arg3[%c0_38, %c0_39] : memref<9x2xf32, #tpu.memory_space<vmem>>, vector<1x2xf32>
    tpu.vector_store %arg3[%c0_38, %c0_39], %460 {strides = array<i32>} : memref<9x2xf32, #tpu.memory_space<vmem>>, vector<1x2xf32>,
    %c1 = arith.constant 1 : index
    %c0_40 = arith.constant 0 : index
    %462 = vector.load %arg3[%c1, %c0_40] : memref<9x2xf32, #tpu.memory_space<vmem>>, vector<2x2xf32>
    tpu.vector_store %arg3[%c1, %c0_40], %409 {strides = array<i32>} : memref<9x2xf32, #tpu.memory_space<vmem>>, vector<2x2xf32>,
    %c3 = arith.constant 3 : index
    %c0_41 = arith.constant 0 : index
    %463 = vector.load %arg3[%c3, %c0_41] : memref<9x2xf32, #tpu.memory_space<vmem>>, vector<2x2xf32>
    tpu.vector_store %arg3[%c3, %c0_41], %451 {strides = array<i32>} : memref<9x2xf32, #tpu.memory_space<vmem>>, vector<2x2xf32>,
    %c5 = arith.constant 5 : index
    %c0_42 = arith.constant 0 : index
    %464 = vector.load %arg3[%c5, %c0_42] : memref<9x2xf32, #tpu.memory_space<vmem>>, vector<2x2xf32>
    tpu.vector_store %arg3[%c5, %c0_42], %407 {strides = array<i32>} : memref<9x2xf32, #tpu.memory_space<vmem>>, vector<2x2xf32>,
    %c7 = arith.constant 7 : index
    %c0_43 = arith.constant 0 : index
    %465 = vector.load %arg3[%c7, %c0_43] : memref<9x2xf32, #tpu.memory_space<vmem>>, vector<2x2xf32>
    tpu.vector_store %arg3[%c7, %c0_43], %449 {strides = array<i32>} : memref<9x2xf32, #tpu.memory_space<vmem>>, vector<2x2xf32>,
    return
  }
}

</mosaic_0001>

<llo_original>
// kernel: mgat_forward.1
$region0: #{mgat_forward.1}
  #allocation0 [shape = 'u32[]', space=smem, size = 0x4, offset = 0x4, fixed_abs, tag = 'smem constant byte address 0x4 - core index']
  #allocation1 [shape = 'u32[144,128]{1,0:T(1,128)}', space=vmem, size = 0x12000, scoped, tag = 'internal scratch']
  %s0 = inlined_call_operand.vmem [shape: f32[10,10], index: 0, kind: input, shape index: {}]
  %s1 = inlined_call_operand.vmem [shape: f32[8,2], index: 1, kind: input, shape index: {}]
  %s2 = inlined_call_operand.vmem [shape: f32[8,24], index: 2, kind: input, shape index: {}]
  %s3 = inlined_call_operand.vmem [shape: f32[9,2], index: 3, kind: output, shape index: {}]
  %s4 = sld [smem:[#allocation0]]
  $region22: #{mgat_forward.1} parent=0
    _
  %s6 = ssub.s32 1, %s4
  %s7 = scalar_select 0, %s6, %s4
  // Predicated region
  $region2: #{mgat_forward.1} parent=0 // pred_check
    _
  $region3: #{mgat_forward.1} parent=0 // pred_check_branch
    %9 = sbr.rel (0) target = $region5
  $region4: #{mgat_forward.1} parent=0 // pred_region
    _
  $region5: #{mgat_forward.1} parent=0 // pred_fallthru
    _
  // Predicated region
  $region6: #{mgat_forward.1} parent=0 // pred_check
    _
  $region7: #{mgat_forward.1} parent=0 // pred_check_branch
    %11 = sbr.rel (0) target = $region9
  $region8: #{mgat_forward.1} parent=0 // pred_region
    _
  $region9: #{mgat_forward.1} parent=0 // pred_fallthru
    _
  // Predicated region
  $region10: #{mgat_forward.1} parent=0 // pred_check
    _
  $region11: #{mgat_forward.1} parent=0 // pred_check_branch
    %13 = sbr.rel (0) target = $region13
  $region12: #{mgat_forward.1} parent=0 // pred_region
    _
  $region13: #{mgat_forward.1} parent=0 // pred_fallthru
    _
  %v14 = vld [vmem:[%s2] sm:$0xff]
  %v15 = vld [vmem:[%s0] sm:$0xff]
  %v16 = vld [vmem:[%s0 + $0x8] sm:$0x3]
  %18 = vset.pattern.permute.xlu0 0
  %19 = vperm.xlu0 %18, %v14
  %v20 = vpop.permute.xlu0 %19
  %v22 = vlaneseq
  %v23 = vshrl.u32 %v22, 7
  %v24 = vsub.s32 0, %v23
  %v25 = vrot.slane %v15, %v24
  %v26 = vmul.f32 %v20, %v25
  %27 = vset.pattern.permute.xlu0 16
  %28 = vperm.xlu0 %27, %v14
  %v29 = vpop.permute.xlu0 %28
  %v31 = vadd.f32 %v29, %v26
  %32 = vset.pattern.permute.xlu0 1
  %33 = vperm.xlu0 %32, %v14
  %v34 = vpop.permute.xlu0 %33
  %v36 = vlaneseq
  %v37 = vshrl.u32 %v36, 7
  %v38 = vsub.s32 1, %v37
  %v39 = vrot.slane %v15, %v38
  %v40 = vmul.f32 %v34, %v39
  %v41 = vadd.f32 %v31, %v40
  %42 = vset.pattern.permute.xlu0 2
  %43 = vperm.xlu0 %42, %v14
  %v44 = vpop.permute.xlu0 %43
  %v46 = vlaneseq
  %v47 = vshrl.u32 %v46, 7
  %v48 = vsub.s32 2, %v47
  %v49 = vrot.slane %v15, %v48
  %v50 = vmul.f32 %v44, %v49
  %v51 = vadd.f32 %v41, %v50
  %52 = vset.pattern.permute.xlu0 3
  %53 = vperm.xlu0 %52, %v14
  %v54 = vpop.permute.xlu0 %53
  %v56 = vlaneseq
  %v57 = vshrl.u32 %v56, 7
  %v58 = vsub.s32 3, %v57
  %v59 = vrot.slane %v15, %v58
  %v60 = vmul.f32 %v54, %v59
  %v61 = vadd.f32 %v51, %v60
  %62 = vset.pattern.permute.xlu0 4
  %63 = vperm.xlu0 %62, %v14
  %v64 = vpop.permute.xlu0 %63
  %v66 = vlaneseq
  %v67 = vshrl.u32 %v66, 7
  %v68 = vsub.s32 4, %v67
  %v69 = vrot.slane %v15, %v68
  %v70 = vmul.f32 %v64, %v69
  %v71 = vadd.f32 %v61, %v70
  %72 = vset.pattern.permute.xlu0 5
  %73 = vperm.xlu0 %72, %v14
  %v74 = vpop.permute.xlu0 %73
  %v76 = vlaneseq
  %v77 = vshrl.u32 %v76, 7
  %v78 = vsub.s32 5, %v77
  %v79 = vrot.slane %v15, %v78
  %v80 = vmul.f32 %v74, %v79
  %v81 = vadd.f32 %v71, %v80
  %82 = vset.pattern.permute.xlu0 6
  %83 = vperm.xlu0 %82, %v14
  %v84 = vpop.permute.xlu0 %83
  %v86 = vlaneseq
  %v87 = vshrl.u32 %v86, 7
  %v88 = vsub.s32 6, %v87
  %v89 = vrot.slane %v15, %v88
  %v90 = vmul.f32 %v84, %v89
  %v91 = vadd.f32 %v81, %v90
  %92 = vset.pattern.permute.xlu0 7
  %93 = vperm.xlu0 %92, %v14
  %v94 = vpop.permute.xlu0 %93
  %v96 = vlaneseq
  %v97 = vshrl.u32 %v96, 7
  %v98 = vsub.s32 7, %v97
  %v99 = vrot.slane %v15, %v98
  %v100 = vmul.f32 %v94, %v99
  %v101 = vadd.f32 %v91, %v100
  %102 = vset.pattern.permute.xlu0 8
  %103 = vperm.xlu0 %102, %v14
  %v104 = vpop.permute.xlu0 %103
  %v106 = vlaneseq
  %v107 = vshrl.u32 %v106, 7
  %v108 = vsub.s32 0, %v107
  %v109 = vrot.slane %v16, %v108
  %v110 = vmul.f32 %v104, %v109
  %v111 = vadd.f32 %v101, %v110
  %112 = vset.pattern.permute.xlu0 9
  %113 = vperm.xlu0 %112, %v14
  %v114 = vpop.permute.xlu0 %113
  %v116 = vlaneseq
  %v117 = vshrl.u32 %v116, 7
  %v118 = vsub.s32 1, %v117
  %v119 = vrot.slane %v16, %v118
  %v120 = vmul.f32 %v114, %v119
  %v121 = vadd.f32 %v111, %v120
  %v122 = vld [vmem:[%s1] sm:$0x3]
  %v123 = vld [vmem:[%s1 + $0x2] sm:$0x3]
  %v124 = vld [vmem:[%s1 + $0x4] sm:$0x3]
  %v125 = vld [vmem:[%s1 + $0x6] sm:$0x3]
  %126 = vset.pattern.permute.xlu0 10
  %127 = vperm.xlu0 %126, %v14
  %v128 = vpop.permute.xlu0 %127
  %v130 = vlaneseq
  %v131 = vshrl.u32 %v130, 7
  %v132 = vsub.s32 0, %v131
  %v133 = vrot.slane %v122, %v132
  %v134 = vmul.f32 %v128, %v133
  %135 = vset.pattern.permute.xlu0 11
  %136 = vperm.xlu0 %135, %v14
  %v137 = vpop.permute.xlu0 %136
  %v139 = vlaneseq
  %v140 = vshrl.u32 %v139, 7
  %v141 = vsub.s32 1, %v140
  %v142 = vrot.slane %v122, %v141
  %v143 = vmul.f32 %v137, %v142
  %v144 = vadd.f32 %v134, %v143
  %v145 = vadd.f32 %v121, %v144
  %v146 = vmul.f32 %v145, 0.5
  %v147 = vtanh.pop %v146
  %v148 = vmul.f32 %v147, 0.5
  %v149 = vadd.f32 %v148, 0.5
  %v150 = vtanh.pop %v145
  %v152 = vrot.slane %v124, 6
  %v154 = vmul.f32 %v149, %v152
  %v156 = vrot.slane %v150, 4
  %v158 = vmul.f32 %v149, %v156
  %v160 = vrot.slane %v158, 6
  %v162 = vadd.f32 %v154, %v160
  %v163 = vtanh.pop %v162
  %v165 = vrot.slane %v163, 4
  %v167 = vmul.f32 %v149, %v165
  %168 = vset.pattern.permute.xlu0 12
  %169 = vperm.xlu0 %168, %v14
  %v170 = vpop.permute.xlu0 %169
  %v172 = vlaneseq
  %v173 = vshrl.u32 %v172, 7
  %v174 = vsub.s32 6, %v173
  %v175 = vrot.slane %v167, %v174
  %v176 = vmul.f32 %v170, %v175
  %177 = vset.pattern.permute.xlu0 13
  %178 = vperm.xlu0 %177, %v14
  %v179 = vpop.permute.xlu0 %178
  %v181 = vlaneseq
  %v182 = vshrl.u32 %v181, 7
  %v183 = vsub.s32 7, %v182
  %v184 = vrot.slane %v167, %v183
  %v185 = vmul.f32 %v179, %v184
  %v186 = vadd.f32 %v176, %v185
  %187 = vset.pattern.permute.xlu0 17
  %188 = vperm.xlu0 %187, %v14
  %v189 = vpop.permute.xlu0 %188
  %v191 = vadd.f32 %v189, %v186
  %192 = vset.pattern.permute.xlu0 14
  %193 = vperm.xlu0 %192, %v14
  %v194 = vpop.permute.xlu0 %193
  %v196 = vlaneseq
  %v197 = vshrl.u32 %v196, 7
  %v198 = vsub.s32 0, %v197
  %v199 = vrot.slane %v123, %v198
  %v200 = vmul.f32 %v194, %v199
  %201 = vset.pattern.permute.xlu0 15
  %202 = vperm.xlu0 %201, %v14
  %v203 = vpop.permute.xlu0 %202
  %v205 = vlaneseq
  %v206 = vshrl.u32 %v205, 7
  %v207 = vsub.s32 1, %v206
  %v208 = vrot.slane %v123, %v207
  %v209 = vmul.f32 %v203, %v208
  %v210 = vadd.f32 %v200, %v209
  %v211 = vadd.f32 %v191, %v210
  %v212 = vmul.f32 %v211, 0.5
  %v213 = vtanh.pop %v212
  %v214 = vmul.f32 %v213, 0.5
  %v215 = vadd.f32 %v214, 0.5
  %v216 = vtanh.pop %v211
  %v218 = vrot.slane %v125, 6
  %v220 = vmul.f32 %v215, %v218
  %v222 = vrot.slane %v216, 4
  %v224 = vmul.f32 %v215, %v222
  %v226 = vrot.slane %v224, 6
  %v228 = vadd.f32 %v220, %v226
  %v229 = vtanh.pop %v228
  %v231 = vrot.slane %v229, 4
  %v233 = vmul.f32 %v215, %v231
  %234 = vset.pattern.permute.xlu0 18
  %235 = vperm.xlu0 %234, %v14
  %v236 = vpop.permute.xlu0 %235
  %v237 = vrot.slane %v236, 2
  %v239 = vmul.f32 %v233, %v237
  %v240 = vadd.f32 %v239, 0.0
  %v241 = vmul.f32 %v128, %v175
  %v242 = vmul.f32 %v137, %v184
  %v243 = vadd.f32 %v241, %v242
  %245 = vrot.lane.b32.xlu0 %v243, 2
  %v246 = vpop.permute.xlu0 %245
  %v248 = vadd.f32 %v121, %v246
  %v249 = vmul.f32 %v248, 0.5
  %v250 = vtanh.pop %v249
  %v251 = vmul.f32 %v250, 0.5
  %v252 = vadd.f32 %v251, 0.5
  %v253 = vtanh.pop %v248
  %255 = vrot.lane.b32.xlu0 %v162, 2
  %v256 = vpop.permute.xlu0 %255
  %v258 = vmul.f32 %v252, %v256
  %v260 = vrot.slane %v253, 4
  %v262 = vmul.f32 %v252, %v260
  %v264 = vrot.slane %v262, 6
  %v266 = vadd.f32 %v258, %v264
  %v267 = vtanh.pop %v266
  %v269 = vrot.slane %v267, 4
  %v271 = vmul.f32 %v252, %v269
  %v272 = vlaneseq
  %v273 = vshrl.u32 %v272, 7
  %v274 = vsub.s32 6, %v273
  %v275 = vrot.slane %v271, %v274
  %v276 = vmul.f32 %v170, %v275
  %v277 = vlaneseq
  %v278 = vshrl.u32 %v277, 7
  %v279 = vsub.s32 7, %v278
  %v280 = vrot.slane %v271, %v279
  %v281 = vmul.f32 %v179, %v280
  %v282 = vadd.f32 %v276, %v281
  %v283 = vadd.f32 %v189, %v282
  %v284 = vlaneseq
  %v285 = vshrl.u32 %v284, 7
  %v286 = vsub.s32 6, %v285
  %v287 = vrot.slane %v233, %v286
  %v288 = vmul.f32 %v194, %v287
  %v289 = vlaneseq
  %v290 = vshrl.u32 %v289, 7
  %v291 = vsub.s32 7, %v290
  %v292 = vrot.slane %v233, %v291
  %v293 = vmul.f32 %v203, %v292
  %v294 = vadd.f32 %v288, %v293
  %296 = vrot.lane.b32.xlu0 %v294, 2
  %v297 = vpop.permute.xlu0 %296
  %v299 = vadd.f32 %v283, %v297
  %v300 = vmul.f32 %v299, 0.5
  %v301 = vtanh.pop %v300
  %v302 = vmul.f32 %v301, 0.5
  %v303 = vadd.f32 %v302, 0.5
  %v304 = vtanh.pop %v299
  %306 = vrot.lane.b32.xlu0 %v228, 2
  %v307 = vpop.permute.xlu0 %306
  %v309 = vmul.f32 %v303, %v307
  %v311 = vrot.slane %v304, 4
  %v313 = vmul.f32 %v303, %v311
  %v315 = vrot.slane %v313, 6
  %v317 = vadd.f32 %v309, %v315
  %v318 = vtanh.pop %v317
  %v320 = vrot.slane %v318, 4
  %v322 = vmul.f32 %v303, %v320
  %323 = vset.pattern.permute.xlu0 19
  %324 = vperm.xlu0 %323, %v14
  %v325 = vpop.permute.xlu0 %324
  %v326 = vrot.slane %v325, 2
  %v328 = vmul.f32 %v322, %v326
  %330 = vrot.lane.b32.xlu0 %v328, 126
  %v331 = vpop.permute.xlu0 %330
  %v333 = vadd.f32 %v240, %v331
  %v334 = vmul.f32 %v128, %v275
  %v335 = vmul.f32 %v137, %v280
  %v336 = vadd.f32 %v334, %v335
  %338 = vrot.lane.b32.xlu0 %v336, 2
  %v339 = vpop.permute.xlu0 %338
  %v341 = vadd.f32 %v121, %v339
  %v342 = vmul.f32 %v341, 0.5
  %v343 = vtanh.pop %v342
  %v344 = vmul.f32 %v343, 0.5
  %v345 = vadd.f32 %v344, 0.5
  %v346 = vtanh.pop %v341
  %348 = vrot.lane.b32.xlu0 %v266, 2
  %v349 = vpop.permute.xlu0 %348
  %v351 = vmul.f32 %v345, %v349
  %v353 = vrot.slane %v346, 4
  %v355 = vmul.f32 %v345, %v353
  %v357 = vrot.slane %v355, 6
  %v359 = vadd.f32 %v351, %v357
  %v360 = vtanh.pop %v359
  %v362 = vrot.slane %v360, 4
  %v364 = vmul.f32 %v345, %v362
  %v365 = vlaneseq
  %v366 = vshrl.u32 %v365, 7
  %v367 = vsub.s32 6, %v366
  %v368 = vrot.slane %v364, %v367
  %v369 = vmul.f32 %v170, %v368
  %v370 = vlaneseq
  %v371 = vshrl.u32 %v370, 7
  %v372 = vsub.s32 7, %v371
  %v373 = vrot.slane %v364, %v372
  %v374 = vmul.f32 %v179, %v373
  %v375 = vadd.f32 %v369, %v374
  %v376 = vadd.f32 %v189, %v375
  %v377 = vlaneseq
  %v378 = vshrl.u32 %v377, 7
  %v379 = vsub.s32 6, %v378
  %v380 = vrot.slane %v322, %v379
  %v381 = vmul.f32 %v194, %v380
  %v382 = vlaneseq
  %v383 = vshrl.u32 %v382, 7
  %v384 = vsub.s32 7, %v383
  %v385 = vrot.slane %v322, %v384
  %v386 = vmul.f32 %v203, %v385
  %v387 = vadd.f32 %v381, %v386
  %389 = vrot.lane.b32.xlu0 %v387, 2
  %v390 = vpop.permute.xlu0 %389
  %v392 = vadd.f32 %v376, %v390
  %v393 = vmul.f32 %v392, 0.5
  %v394 = vtanh.pop %v393
  %v395 = vmul.f32 %v394, 0.5
  %v396 = vadd.f32 %v395, 0.5
  %v397 = vtanh.pop %v392
  %399 = vrot.lane.b32.xlu0 %v317, 2
  %v400 = vpop.permute.xlu0 %399
  %v402 = vmul.f32 %v396, %v400
  %v404 = vrot.slane %v397, 4
  %v406 = vmul.f32 %v396, %v404
  %v408 = vrot.slane %v406, 6
  %v410 = vadd.f32 %v402, %v408
  %v411 = vtanh.pop %v410
  %v413 = vrot.slane %v411, 4
  %v415 = vmul.f32 %v396, %v413
  %416 = vset.pattern.permute.xlu0 20
  %417 = vperm.xlu0 %416, %v14
  %v418 = vpop.permute.xlu0 %417
  %v419 = vrot.slane %v418, 2
  %v421 = vmul.f32 %v415, %v419
  %423 = vrot.lane.b32.xlu0 %v421, 124
  %v424 = vpop.permute.xlu0 %423
  %v426 = vadd.f32 %v333, %v424
  %v427 = vmul.f32 %v128, %v368
  %v428 = vmul.f32 %v137, %v373
  %v429 = vadd.f32 %v427, %v428
  %431 = vrot.lane.b32.xlu0 %v429, 2
  %v432 = vpop.permute.xlu0 %431
  %v434 = vadd.f32 %v121, %v432
  %v435 = vmul.f32 %v434, 0.5
  %v436 = vtanh.pop %v435
  %v437 = vmul.f32 %v436, 0.5
  %v438 = vadd.f32 %v437, 0.5
  %v439 = vtanh.pop %v434
  %441 = vrot.lane.b32.xlu0 %v359, 2
  %v442 = vpop.permute.xlu0 %441
  %v444 = vmul.f32 %v438, %v442
  %v446 = vrot.slane %v439, 4
  %v448 = vmul.f32 %v438, %v446
  %v450 = vrot.slane %v448, 6
  %v452 = vadd.f32 %v444, %v450
  %v453 = vtanh.pop %v452
  %v455 = vrot.slane %v453, 4
  %v457 = vmul.f32 %v438, %v455
  %v458 = vlaneseq
  %v459 = vshrl.u32 %v458, 7
  %v460 = vsub.s32 6, %v459
  %v461 = vrot.slane %v457, %v460
  %v462 = vmul.f32 %v170, %v461
  %v463 = vlaneseq
  %v464 = vshrl.u32 %v463, 7
  %v465 = vsub.s32 7, %v464
  %v466 = vrot.slane %v457, %v465
  %v467 = vmul.f32 %v179, %v466
  %v468 = vadd.f32 %v462, %v467
  %v469 = vadd.f32 %v189, %v468
  %v470 = vlaneseq
  %v471 = vshrl.u32 %v470, 7
  %v472 = vsub.s32 6, %v471
  %v473 = vrot.slane %v415, %v472
  %v474 = vmul.f32 %v194, %v473
  %v475 = vlaneseq
  %v476 = vshrl.u32 %v475, 7
  %v477 = vsub.s32 7, %v476
  %v478 = vrot.slane %v415, %v477
  %v479 = vmul.f32 %v203, %v478
  %v480 = vadd.f32 %v474, %v479
  %482 = vrot.lane.b32.xlu0 %v480, 2
  %v483 = vpop.permute.xlu0 %482
  %v485 = vadd.f32 %v469, %v483
  %v486 = vmul.f32 %v485, 0.5
  %v487 = vtanh.pop %v486
  %v488 = vmul.f32 %v487, 0.5
  %v489 = vadd.f32 %v488, 0.5
  %v490 = vtanh.pop %v485
  %492 = vrot.lane.b32.xlu0 %v410, 2
  %v493 = vpop.permute.xlu0 %492
  %v495 = vmul.f32 %v489, %v493
  %v497 = vrot.slane %v490, 4
  %v499 = vmul.f32 %v489, %v497
  %v501 = vrot.slane %v499, 6
  %v503 = vadd.f32 %v495, %v501
  %v504 = vtanh.pop %v503
  %v506 = vrot.slane %v504, 4
  %v508 = vmul.f32 %v489, %v506
  %509 = vset.pattern.permute.xlu0 21
  %510 = vperm.xlu0 %509, %v14
  %v511 = vpop.permute.xlu0 %510
  %v512 = vrot.slane %v511, 2
  %v514 = vmul.f32 %v508, %v512
  %516 = vrot.lane.b32.xlu0 %v514, 122
  %v517 = vpop.permute.xlu0 %516
  %v519 = vadd.f32 %v426, %v517
  %v520 = vmul.f32 %v128, %v461
  %v521 = vmul.f32 %v137, %v466
  %v522 = vadd.f32 %v520, %v521
  %524 = vrot.lane.b32.xlu0 %v522, 2
  %v525 = vpop.permute.xlu0 %524
  %v527 = vadd.f32 %v121, %v525
  %v528 = vmul.f32 %v527, 0.5
  %v529 = vtanh.pop %v528
  %v530 = vmul.f32 %v529, 0.5
  %v531 = vadd.f32 %v530, 0.5
  %v532 = vtanh.pop %v527
  %534 = vrot.lane.b32.xlu0 %v452, 2
  %v535 = vpop.permute.xlu0 %534
  %v537 = vmul.f32 %v531, %v535
  %v539 = vrot.slane %v532, 4
  %v541 = vmul.f32 %v531, %v539
  %v543 = vrot.slane %v541, 6
  %v545 = vadd.f32 %v537, %v543
  %v546 = vtanh.pop %v545
  %v548 = vrot.slane %v546, 4
  %v550 = vmul.f32 %v531, %v548
  %v551 = vlaneseq
  %v552 = vshrl.u32 %v551, 7
  %v553 = vsub.s32 6, %v552
  %v554 = vrot.slane %v550, %v553
  %v555 = vmul.f32 %v170, %v554
  %v556 = vlaneseq
  %v557 = vshrl.u32 %v556, 7
  %v558 = vsub.s32 7, %v557
  %v559 = vrot.slane %v550, %v558
  %v560 = vmul.f32 %v179, %v559
  %v561 = vadd.f32 %v555, %v560
  %v562 = vadd.f32 %v189, %v561
  %v563 = vlaneseq
  %v564 = vshrl.u32 %v563, 7
  %v565 = vsub.s32 6, %v564
  %v566 = vrot.slane %v508, %v565
  %v567 = vmul.f32 %v194, %v566
  %v568 = vlaneseq
  %v569 = vshrl.u32 %v568, 7
  %v570 = vsub.s32 7, %v569
  %v571 = vrot.slane %v508, %v570
  %v572 = vmul.f32 %v203, %v571
  %v573 = vadd.f32 %v567, %v572
  %575 = vrot.lane.b32.xlu0 %v573, 2
  %v576 = vpop.permute.xlu0 %575
  %v578 = vadd.f32 %v562, %v576
  %v579 = vmul.f32 %v578, 0.5
  %v580 = vtanh.pop %v579
  %v581 = vmul.f32 %v580, 0.5
  %v582 = vadd.f32 %v581, 0.5
  %v583 = vtanh.pop %v578
  %585 = vrot.lane.b32.xlu0 %v503, 2
  %v586 = vpop.permute.xlu0 %585
  %v588 = vmul.f32 %v582, %v586
  %v590 = vrot.slane %v583, 4
  %v592 = vmul.f32 %v582, %v590
  %v594 = vrot.slane %v592, 6
  %v596 = vadd.f32 %v588, %v594
  %v597 = vtanh.pop %v596
  %v599 = vrot.slane %v597, 4
  %v601 = vmul.f32 %v582, %v599
  %602 = vset.pattern.permute.xlu0 22
  %603 = vperm.xlu0 %602, %v14
  %v604 = vpop.permute.xlu0 %603
  %v605 = vrot.slane %v604, 2
  %v607 = vmul.f32 %v601, %v605
  %609 = vrot.lane.b32.xlu0 %v607, 120
  %v610 = vpop.permute.xlu0 %609
  %v612 = vadd.f32 %v519, %v610
  %v614 = vrot.slane %v612, 1
  %v616 = vadd.f32 %v612, %v614
  %617 = vset.pattern.permute.xlu0 23
  %618 = vperm.xlu0 %617, %v14
  %v619 = vpop.permute.xlu0 %618
  %v620 = vrot.slane %v619, 2
  %v622 = vadd.f32 %v616, %v620
  %vm623 = vcmask 14342
  %624 = vst.msk [vmem:[%s3 - $0x6] sm:$0x40] %vm623, %v622
  %626 = vrot.lane.b32.xlu0 %v550, 120
  %v627 = vpop.permute.xlu0 %626
  %vm629 = vcmask 15366
  %630 = vst.msk [vmem:[%s3 - $0x5] sm:$0xc0] %vm629, %v627
  %632 = vrot.lane.b32.xlu0 %v601, 120
  %v633 = vpop.permute.xlu0 %632
  %635 = vst.msk [vmem:[%s3 - $0x3] sm:$0xc0] %vm629, %v633
  %637 = vrot.lane.b32.xlu0 %v545, 120
  %v638 = vpop.permute.xlu0 %637
  %vm640 = vcmask 11266
  %641 = vst.msk [vmem:[%s3 + $0x3] sm:$0xc] %vm640, %v638
  %643 = vrot.lane.b32.xlu0 %v596, 120
  %v644 = vpop.permute.xlu0 %643
  %646 = vst.msk [vmem:[%s3 + $0x5] sm:$0xc] %vm640, %v644
  // Predicated region
  $region14: #{mgat_forward.1} parent=0 // pred_check
    _
  $region15: #{mgat_forward.1} parent=0 // pred_check_branch
    %648 = sbr.rel (0) target = $region17
  $region16: #{mgat_forward.1} parent=0 // pred_region
    _
  $region17: #{mgat_forward.1} parent=0 // pred_fallthru
    _
  // Predicated region
  $region18: #{mgat_forward.1} parent=0 // pred_check
    _
  $region19: #{mgat_forward.1} parent=0 // pred_check_branch
    %650 = sbr.rel (0) target = $region21
  $region20: #{mgat_forward.1} parent=0 // pred_region
    _
  $region21: #{mgat_forward.1} parent=0 // pred_fallthru
    _

</llo_original>
